<compile_context>
chip_gen: v7x
topology: tpu7x:2x2x1
jax: 0.10.0
libtpu: 0.0.40
codegen_flags: <defaults>
</compile_context>

<pallas_src>
import functools

import jax
import jax.numpy as jnp
from jax.experimental import pallas as pl
from jax.experimental.pallas import tpu as pltpu

LN_EPS = 1e-5


def _round_up(x, n):
    return ((x + n - 1) // n) * n


def _cdiv(a, b):
    return (a + b - 1) // b


def _physical_vmem_bytes():
    """Per-core physical VMEM (generation-aware); conservative fallback."""
    try:
        info = pltpu.get_tpu_info()
        for attr in ("vmem_capacity_bytes", "vmem_size_bytes", "vmem_bytes"):
            v = getattr(info, attr, None)
            if v:
                return int(v)
    except Exception:
        pass
    return 64 * 1024 * 1024  # v7x worst case


def _ln_relu_epilogue(y, b, gamma, beta, cout_true, cout_pad):
    """bias + LayerNorm over the true out_channels + ReLU, all in f32."""
    inv_n = 1.0 / float(cout_true)
    y = y + b
    mean = jnp.sum(y, axis=-1, keepdims=True) * inv_n
    yc = y - mean
    ssq = jnp.sum(yc * yc, axis=-1, keepdims=True)
    if cout_pad != cout_true:
        # Padded columns of y are exactly 0 (zero W columns, zero bias), so
        # each contributes (0 - mean)^2 to ssq; remove that exactly.
        ssq = ssq - float(cout_pad - cout_true) * (mean * mean)
    var = jnp.maximum(ssq * inv_n, 0.0)
    scale = jax.lax.rsqrt(var + LN_EPS) * gamma  # fold gamma into the scale
    return jnp.maximum(yc * scale + beta, 0.0)


def _kernel_single_k(x_ref, w_ref, b_ref, g_ref, be_ref, o_ref, *, cout, cout_pad):
    # Whole reduction dim in one tile: no accumulator scratch, no pl.when.
    y = jnp.dot(
        x_ref[...].astype(jnp.bfloat16), w_ref[...],
        preferred_element_type=jnp.float32,
    )
    o_ref[...] = _ln_relu_epilogue(
        y, b_ref[...], g_ref[...], be_ref[...], cout, cout_pad
    ).astype(o_ref.dtype)


def _kernel_k_tiled(x_ref, w_ref, b_ref, g_ref, be_ref, o_ref, acc_ref, *,
                    cout, cout_pad):
    k = pl.program_id(1)

    @pl.when(k == 0)
    def _init():
        acc_ref[...] = jnp.zeros_like(acc_ref)

    acc_ref[...] += jnp.dot(
        x_ref[...].astype(jnp.bfloat16), w_ref[...],
        preferred_element_type=jnp.float32,
    )

    @pl.when(k == pl.num_programs(1) - 1)
    def _finalize():
        o_ref[...] = _ln_relu_epilogue(
            acc_ref[...], b_ref[...], g_ref[...], be_ref[...], cout, cout_pad
        ).astype(o_ref.dtype)


def prepare_mlp_params(weight, bias, gamma, beta, *, tk_max=512):
    """One-time parameter prep (hoisted out of the per-call path).

    weight: [in_channels, out_channels] f32. Cast to bf16, pad Cin to a
    multiple of the K tile and Cout to a multiple of 128 lanes (zero padding
    keeps the matmul and the LN statistics exact)."""
    cin, cout = weight.shape
    cin_128 = _round_up(cin, 128)
    grid_k = _cdiv(cin_128, _round_up(tk_max, 128))
    tk = _round_up(_cdiv(cin_128, grid_k), 128)   # large, balanced K tile
    cin_pad = grid_k * tk
    cout_pad = _round_up(cout, 128)               # lane-dense output

    w = weight.astype(jnp.bfloat16)
    if (cin_pad, cout_pad) != (cin, cout):
        w = jnp.pad(w, ((0, cin_pad - cin), (0, cout_pad - cout)))
    pad_c = (0, cout_pad - cout)
    b = jnp.pad(bias.astype(jnp.float32), pad_c).reshape(1, cout_pad)
    g = jnp.pad(gamma.astype(jnp.float32), pad_c).reshape(1, cout_pad)
    be = jnp.pad(beta.astype(jnp.float32), pad_c).reshape(1, cout_pad)
    return dict(w=w, b=b, gamma=g, beta=be, cin=cin, cout=cout, tk=tk)


def mlp_block(x, params, *, tm_pref=512, out_dtype=None):
    """x: [..., in_channels]; params: output of prepare_mlp_params()."""
    w, b2d, g2d, be2d = params["w"], params["b"], params["gamma"], params["beta"]
    in_channels, out_channels, tk = params["cin"], params["cout"], params["tk"]
    cin_pad, cout_pad = w.shape
    grid_k = cin_pad // tk
    assert x.shape[-1] == in_channels

    lead_shape = x.shape[:-1]
    m = 1
    for d in lead_shape:
        m *= d
    x2d = x.reshape(m, in_channels)
    out_dtype = out_dtype or x.dtype
    x_bytes = jnp.dtype(x.dtype).itemsize
    out_bytes = jnp.dtype(out_dtype).itemsize

    # ---- Generation-aware VMEM budget and row-tile selection.
    phys_vmem = _physical_vmem_bytes()
    vmem_limit = max(
        min(phys_vmem - 16 * 1024 * 1024, 100 * 1024 * 1024), 32 * 1024 * 1024
    )
    budget = int(vmem_limit * 0.75)

    def est(tm_):
        e = 2 * tm_ * tk * x_bytes            # x blocks (double-buffered)
        e += 2 * tk * cout_pad * 2            # bf16 weight blocks
        e += 2 * tm_ * cout_pad * out_bytes   # output blocks
        if grid_k > 1:
            e += tm_ * cout_pad * 4           # f32 accumulator scratch
        e += 6 * cout_pad * 4                 # bias / gamma / beta
        return e

    tm = min(_round_up(max(m, 1), 16), _round_up(tm_pref, 16))
    while tm > 16 and est(tm) > budget:
        tm = _round_up(max(tm // 2, 16), 16)
    # Megacore: give the "parallel" row axis >= 2 blocks when possible so
    # small-batch calls shard across both TensorCores on v7x.
    while tm >= 32 and _cdiv(m, tm) < 2:
        tm = _round_up(tm // 2, 16)

    m_pad = _round_up(m, tm)
    grid_m = m_pad // tm

    # ---- Pad x only when actually needed; otherwise pass it through as-is
    # (no wrapper pad/cast pass — the bf16 cast happens inside the kernel).
    if m_pad != m or cin_pad != in_channels:
        x2d = jnp.pad(x2d, ((0, m_pad - m), (0, cin_pad - in_channels)))

    compiler_params = pltpu.CompilerParams(
        dimension_semantics=("parallel",) if grid_k == 1
        else ("parallel", "arbitrary"),
        vmem_limit_bytes=vmem_limit,
    )

    if grid_k == 1:
        kernel = functools.partial(
            _kernel_single_k, cout=out_channels, cout_pad=cout_pad)
        grid_spec = pltpu.PrefetchScalarGridSpec(
            num_scalar_prefetch=0,
            grid=(grid_m,),
            in_specs=[
                pl.BlockSpec((tm, cin_pad), lambda i: (i, 0)),
                pl.BlockSpec((cin_pad, cout_pad), lambda i: (0, 0)),
                pl.BlockSpec((1, cout_pad), lambda i: (0, 0)),
                pl.BlockSpec((1, cout_pad), lambda i: (0, 0)),
                pl.BlockSpec((1, cout_pad), lambda i: (0, 0)),
            ],
            out_specs=pl.BlockSpec((tm, cout_pad), lambda i: (i, 0)),
        )
    else:
        kernel = functools.partial(
            _kernel_k_tiled, cout=out_channels, cout_pad=cout_pad)
        grid_spec = pltpu.PrefetchScalarGridSpec(
            num_scalar_prefetch=0,
            grid=(grid_m, grid_k),
            in_specs=[
                pl.BlockSpec((tm, tk), lambda i, k: (i, k)),
                pl.BlockSpec((tk, cout_pad), lambda i, k: (k, 0)),
                pl.BlockSpec((1, cout_pad), lambda i, k: (0, 0)),
                pl.BlockSpec((1, cout_pad), lambda i, k: (0, 0)),
                pl.BlockSpec((1, cout_pad), lambda i, k: (0, 0)),
            ],
            out_specs=pl.BlockSpec((tm, cout_pad), lambda i, k: (i, 0)),
            scratch_shapes=[pltpu.VMEM((tm, cout_pad), jnp.float32)],
        )

    out = pl.pallas_call(
        kernel,
        out_shape=jax.ShapeDtypeStruct((m_pad, cout_pad), out_dtype),
        grid_spec=grid_spec,
        compiler_params=compiler_params,
    )(x2d, w, b2d, g2d, be2d)

    out = out[:m, :out_channels]
    return out.reshape(*lead_shape, out_channels)


def _reference(x, weight, bias, gamma, beta):
    # Mirrors the kernel's bf16 matmul inputs / f32 accumulation + f32 LN/ReLU.
    # (bf16 inputs are an accepted approximation vs PyTorch's f32 nn.Linear.)
    xb = x.astype(jnp.bfloat16)
    wb = weight.astype(jnp.bfloat16)
    y = jnp.einsum(
        "...i,io->...o", xb, wb, preferred_element_type=jnp.float32
    ) + bias
    mean = jnp.mean(y, axis=-1, keepdims=True)
    var = jnp.mean((y - mean) ** 2, axis=-1, keepdims=True)
    y = (y - mean) * jax.lax.rsqrt(var + LN_EPS) * gamma + beta
    return jnp.maximum(y, 0.0)


if __name__ == "__main__":
    key = jax.random.PRNGKey(0)

    def make_case(k, batch, seq, cin, cout):
        kx, kw, kb = jax.random.split(k, 3)
        x = jax.random.normal(kx, (batch, seq, cin), dtype=jnp.float32)
        # nn.Linear init: U(-1/sqrt(in), 1/sqrt(in)); stored as [Cin, Cout].
        lim = 1.0 / (cin ** 0.5)
        weight = jax.random.uniform(kw, (cin, cout), jnp.float32, -lim, lim)
        bias = jax.random.uniform(kb, (cout,), jnp.float32, -lim, lim)
        # nn.LayerNorm init: gamma=1, beta=0
        gamma = jnp.ones((cout,), jnp.float32)
        beta = jnp.zeros((cout,), jnp.float32)
        return x, weight, bias, gamma, beta

    k1, k2 = jax.random.split(key)

    # Case 1: lane-dense channels, Cin fits one K tile -> single-K kernel,
    # no padding, no wrapper copies of x.
    x, weight, bias, gamma, beta = make_case(k1, 2, 128, 128, 256)
    params = prepare_mlp_params(weight, bias, gamma, beta)  # one-time prep
    out = jax.block_until_ready(mlp_block(x, params))
    ref = _reference(x, weight, bias, gamma, beta)
    assert out.shape == ref.shape
    assert jnp.allclose(out, ref, atol=2e-3, rtol=2e-3), "mismatch (case 1)"

    # Case 2: Cin requires K tiling and Cout requires lane padding ->
    # exercises the accumulator kernel and the padded-LN correction.
    x2, w2, b2, g2, be2 = make_case(k2, 2, 8, 640, 192)
    params2 = prepare_mlp_params(w2, b2, g2, be2, tk_max=512)
    out2 = jax.block_until_ready(mlp_block(x2, params2))
    ref2 = _reference(x2, w2, b2, g2, be2)
    assert out2.shape == ref2.shape
    assert jnp.allclose(out2, ref2, atol=2e-3, rtol=2e-3), "mismatch (case 2)"

    print("KERNEL_OK")
</pallas_src>

<mosaic_0001>
module attributes {stable_mosaic.version = 11 : i64} {
  func.func @_kernel_single_k(%arg0: i32, %arg1: memref<128x128xf32, #tpu.memory_space<vmem>>, %arg2: memref<128x256xbf16, #tpu.memory_space<vmem>>, %arg3: memref<1x256xf32, #tpu.memory_space<vmem>>, %arg4: memref<1x256xf32, #tpu.memory_space<vmem>>, %arg5: memref<1x256xf32, #tpu.memory_space<vmem>>, %arg6: memref<128x256xf32, #tpu.memory_space<vmem>>) attributes {dimension_semantics = [#tpu.dimension_semantics<parallel>], iteration_bounds = array<i64: 2>, scalar_prefetch = 0 : i64, scratch_operands = 0 : i64, tpu.core_type = #tpu.core_type<tc>, window_params = [{transform_indices = @transform_0, window_bounds = array<i64: 128, 128>}, {pipeline_mode = #tpu.pipeline_mode<synchronous>, transform_indices = @transform_1, window_bounds = array<i64: 128, 256>}, {pipeline_mode = #tpu.pipeline_mode<synchronous>, transform_indices = @transform_2, window_bounds = array<i64: 1, 256>}, {pipeline_mode = #tpu.pipeline_mode<synchronous>, transform_indices = @transform_3, window_bounds = array<i64: 1, 256>}, {pipeline_mode = #tpu.pipeline_mode<synchronous>, transform_indices = @transform_4, window_bounds = array<i64: 1, 256>}, {transform_indices = @transform_5, window_bounds = array<i64: 128, 256>}]} {
    %c0 = arith.constant 0 : index
    %c0_0 = arith.constant 0 : index
    %0 = vector.load %arg1[%c0, %c0_0] : memref<128x128xf32, #tpu.memory_space<vmem>>, vector<128x128xf32>
    %1 = arith.truncf %0 : vector<128x128xf32> to vector<128x128xbf16>
    %c0_1 = arith.constant 0 : index
    %c0_2 = arith.constant 0 : index
    %2 = vector.load %arg2[%c0_1, %c0_2] : memref<128x256xbf16, #tpu.memory_space<vmem>>, vector<128x256xbf16>
    %cst = arith.constant dense<0.000000e+00> : vector<128x256xf32>
    %3 = tpu.matmul %1, %2, %cst {dimension_numbers = #tpu.dot_dimension_numbers<[1], [0], [0], [1], [0, 0, 1, 1], [], []>} : vector<128x128xbf16>, vector<128x256xbf16>, vector<128x256xf32> -> vector<128x256xf32>
    %c0_3 = arith.constant 0 : index
    %c0_4 = arith.constant 0 : index
    %4 = vector.load %arg3[%c0_3, %c0_4] : memref<1x256xf32, #tpu.memory_space<vmem>>, vector<1x256xf32>
    %c0_5 = arith.constant 0 : index
    %c0_6 = arith.constant 0 : index
    %5 = vector.load %arg4[%c0_5, %c0_6] : memref<1x256xf32, #tpu.memory_space<vmem>>, vector<1x256xf32>
    %c0_7 = arith.constant 0 : index
    %c0_8 = arith.constant 0 : index
    %6 = vector.load %arg5[%c0_7, %c0_8] : memref<1x256xf32, #tpu.memory_space<vmem>>, vector<1x256xf32>
    %7 = vector.broadcast %4 : vector<1x256xf32> to vector<128x256xf32>
    %8 = arith.addf %3, %7 : vector<128x256xf32>
    %cst_9 = arith.constant dense<0.000000e+00> : vector<128xf32>
    %9 = vector.multi_reduction <add>, %8, %cst_9 [1] : vector<128x256xf32> to vector<128xf32>
    %10 = vector.shape_cast %9 : vector<128xf32> to vector<128x1xf32>
    %cst_10 = arith.constant 3.906250e-03 : f32
    %11 = vector.broadcast %cst_10 : f32 to vector<128x1xf32>
    %12 = arith.mulf %10, %11 : vector<128x1xf32>
    %13 = vector.broadcast %12 : vector<128x1xf32> to vector<128x256xf32>
    %14 = arith.subf %8, %13 : vector<128x256xf32>
    %15 = arith.mulf %14, %14 : vector<128x256xf32>
    %cst_11 = arith.constant dense<0.000000e+00> : vector<128xf32>
    %16 = vector.multi_reduction <add>, %15, %cst_11 [1] : vector<128x256xf32> to vector<128xf32>
    %17 = vector.shape_cast %16 : vector<128xf32> to vector<128x1xf32>
    %cst_12 = arith.constant 3.906250e-03 : f32
    %18 = vector.broadcast %cst_12 : f32 to vector<128x1xf32>
    %19 = arith.mulf %17, %18 : vector<128x1xf32>
    %cst_13 = arith.constant 0.000000e+00 : f32
    %20 = vector.broadcast %cst_13 : f32 to vector<128x1xf32>
    %21 = arith.maximumf %19, %20 : vector<128x1xf32>
    %cst_14 = arith.constant 9.99999974E-6 : f32
    %22 = vector.broadcast %cst_14 : f32 to vector<128x1xf32>
    %23 = arith.addf %21, %22 : vector<128x1xf32>
    %24 = math.rsqrt %23 : vector<128x1xf32>
    %25 = vector.broadcast %24 : vector<128x1xf32> to vector<128x256xf32>
    %26 = vector.broadcast %5 : vector<1x256xf32> to vector<128x256xf32>
    %27 = arith.mulf %25, %26 : vector<128x256xf32>
    %28 = arith.mulf %14, %27 : vector<128x256xf32>
    %29 = vector.broadcast %6 : vector<1x256xf32> to vector<128x256xf32>
    %30 = arith.addf %28, %29 : vector<128x256xf32>
    %cst_15 = arith.constant 0.000000e+00 : f32
    %31 = vector.broadcast %cst_15 : f32 to vector<128x256xf32>
    %32 = arith.maximumf %30, %31 : vector<128x256xf32>
    %c0_16 = arith.constant 0 : index
    %c0_17 = arith.constant 0 : index
    %33 = vector.load %arg6[%c0_16, %c0_17] : memref<128x256xf32, #tpu.memory_space<vmem>>, vector<128x256xf32>
    tpu.vector_store %arg6[%c0_16, %c0_17], %32 {strides = array<i32>} : memref<128x256xf32, #tpu.memory_space<vmem>>, vector<128x256xf32>,
    return
  }
  func.func @transform_0(%arg0: i32) -> (i32, i32) {
    %c0_i32 = arith.constant 0 : i32
    %c0_i32_0 = arith.constant 0 : i32
    return %arg0, %c0_i32 : i32, i32
  }
  func.func @transform_1(%arg0: i32) -> (i32, i32) {
    %c0_i32 = arith.constant 0 : i32
    %c0_i32_0 = arith.constant 0 : i32
    %c0_i32_1 = arith.constant 0 : i32
    return %c0_i32, %c0_i32_0 : i32, i32
  }
  func.func @transform_2(%arg0: i32) -> (i32, i32) {
    %c0_i32 = arith.constant 0 : i32
    %c0_i32_0 = arith.constant 0 : i32
    %c0_i32_1 = arith.constant 0 : i32
    return %c0_i32, %c0_i32_0 : i32, i32
  }
  func.func @transform_3(%arg0: i32) -> (i32, i32) {
    %c0_i32 = arith.constant 0 : i32
    %c0_i32_0 = arith.constant 0 : i32
    %c0_i32_1 = arith.constant 0 : i32
    return %c0_i32, %c0_i32_0 : i32, i32
  }
  func.func @transform_4(%arg0: i32) -> (i32, i32) {
    %c0_i32 = arith.constant 0 : i32
    %c0_i32_0 = arith.constant 0 : i32
    %c0_i32_1 = arith.constant 0 : i32
    return %c0_i32, %c0_i32_0 : i32, i32
  }
  func.func @transform_5(%arg0: i32) -> (i32, i32) {
    %c0_i32 = arith.constant 0 : i32
    %c0_i32_0 = arith.constant 0 : i32
    return %arg0, %c0_i32 : i32, i32
  }
}

</mosaic_0001>

<llo_original>
// kernel: tpu_custom_call.1
$region0: #{tpu_custom_call.1}
  #allocation0 [shape = 'u32[]', space=smem, size = 0x4, offset = 0x4, fixed_abs, tag = 'smem constant byte address 0x4 - core index']
  #allocation1 [shape = 'u32[144,128]{1,0:T(1,128)}', space=vmem, size = 0x12000, scoped, tag = 'internal scratch']
  %s0 = inlined_call_operand.hbm [shape: f32[256,128], index: 0, kind: input, shape index: {}]
  %s1 = inlined_call_operand.hbm [shape: bf16[128,256], index: 1, kind: input, shape index: {}]
  %s2 = inlined_call_operand.vmem [shape: f32[1,256], index: 2, kind: input, shape index: {}]
  %s3 = inlined_call_operand.vmem [shape: f32[1,256], index: 3, kind: input, shape index: {}]
  %s4 = inlined_call_operand.vmem [shape: f32[1,256], index: 4, kind: input, shape index: {}]
  %s5 = inlined_call_operand.hbm [shape: f32[256,256], index: 5, kind: output, shape index: {}]
  %s6 = sld [smem:[#allocation0]]
  $region61: #{tpu_custom_call.1} parent=0
    _
  %s8 = ssub.s32 1, %s6
  %s9 = scalar_select 0, %s8, %s6
  $region1: #{tpu_custom_call.1} parent=0
    #allocation2 [shape = 'u8[131072]{0}', space=vmem, size = 0x20000, scoped, tag = 'input window, operand 0']
    #allocation3 [shape = 's32[2]{0}', space=sflag, size = 0x8, scoped, tag = 'scoped memory for tpu_custom_call.1']
    #allocation4 [shape = 's32[2]{0}', space=sflag, size = 0x8, scoped, tag = 'scoped memory for tpu_custom_call.1']
    #allocation5 [shape = 'u8[65536]{0}', space=vmem, size = 0x10000, scoped, tag = 'input window, operand 1, single buffered']
    #allocation6 [shape = 's32[1]{0}', space=sflag, size = 0x4, scoped, tag = 'scoped memory for tpu_custom_call.1']
    #allocation7 [shape = 'u8[262144]{0}', space=vmem, size = 0x40000, scoped, tag = 'output window, operand 0']
    %10 = vsyncpa [#allocation3], 0
    %s11 = scalar_lea.sflag [#allocation3], 1
    %12 = vsyncpa %s11, 0
    %13 = vsyncpa [#allocation6], 0
    %14 = vsyncpa [#allocation4], 0
    %s15 = scalar_lea.sflag [#allocation4], 1
    %16 = vsyncpa %s15, 0
    loop: start=0, step=1, limit=4
    $region2: #{tpu_custom_call.1} parent=1 // loop_pre_header
      _
    $region3: #{tpu_custom_call.1} parent=1 // loop_header
      %s18 = sphi 0, %s22
      %p19 = scmp.ge.s32.totalorder %s18, 4
      %s28 = sphi 0, %s30
      %s31 = sphi 0, %s28
      %s32 = sphi 0, %s31
      %s48 = sphi 0, %s32
      %s52 = sphi 0, %s52
      %s54 = sphi 0, %s52
      %s55 = sphi 0, %s54
      %s69 = sphi 0, %s55
      %s73 = sphi 0, %s73
      %s75 = sphi 0, %s73
      %s76 = sphi 0, %s75
      %s90 = sphi 0, %s76
      %s94 = sphi 0, %s94
      %s96 = sphi 0, %s94
      %s97 = sphi 0, %s96
      %s111 = sphi 0, %s97
      %s115 = sphi 0, %s115
      %s117 = sphi 0, %s115
      %s118 = sphi 0, %s117
      %s132 = sphi 0, %s118
      %s138 = sphi 0, %s140
      %s141 = sphi 0, %s138
      %s142 = sphi 0, %s141
      %s158 = sphi 0, %s142
    $region4: #{tpu_custom_call.1} parent=1 // loop_header_branch
      %21 = sbr.rel (%p19) target = $region8
    $region5: #{tpu_custom_call.1} parent=1 // loop_body
      %s23 = ssub.s32 %s18, 1
      %s24 = ssub.s32 %s18, 2
      %s25 = sadd.s32 %s18, 1
      %s26 = ssub.s32 %s18, %s25
      %p27 = scmp.eq.s32.totalorder %s26, 0
      %s29 = sadd.s32 %s28, 1
      %s30 = scalar_select %p27, %s28, %s29
      %p33 = pneg %p27
      %p34 = scmp.eq.s32.totalorder %s18, 1
      %p35 = por %p33, %p34
      %p36 = scmp.ne.s32.totalorder %s28, %s31
      %p37 = scmp.eq.s32.totalorder %s18, 0
      %p38 = por %p36, %p37
      %p39 = scmp.ne.s32.totalorder %s28, %s31
      %p40 = scmp.eq.s32.totalorder %s23, 1
      %p41 = por %p39, %p40
      %p42 = scmp.ne.s32.totalorder %s31, %s32
      %p43 = scmp.eq.s32.totalorder %s23, 0
      %p44 = por %p42, %p43
      %p45 = scmp.ne.s32.totalorder %s31, %s32
      %p46 = scmp.eq.s32.totalorder %s24, 1
      %p47 = por %p45, %p46
      %p49 = scmp.ne.s32.totalorder %s32, %s48
      %p50 = scmp.eq.s32.totalorder %s24, 0
      %p51 = por %p49, %p50
      %s53 = sadd.s32 %s52, 1
      %p56 = scmp.eq.s32.totalorder %s18, 1
      %p57 = scmp.ne.s32.totalorder %s52, %s54
      %p58 = scmp.eq.s32.totalorder %s18, 0
      %p59 = por %p57, %p58
      %p60 = scmp.ne.s32.totalorder %s52, %s54
      %p61 = scmp.eq.s32.totalorder %s23, 1
      %p62 = por %p60, %p61
      %p63 = scmp.ne.s32.totalorder %s54, %s55
      %p64 = scmp.eq.s32.totalorder %s23, 0
      %p65 = por %p63, %p64
      %p66 = scmp.ne.s32.totalorder %s54, %s55
      %p67 = scmp.eq.s32.totalorder %s24, 1
      %p68 = por %p66, %p67
      %p70 = scmp.ne.s32.totalorder %s55, %s69
      %p71 = scmp.eq.s32.totalorder %s24, 0
      %p72 = por %p70, %p71
      %s74 = sadd.s32 %s73, 1
      %p77 = scmp.eq.s32.totalorder %s18, 1
      %p78 = scmp.ne.s32.totalorder %s73, %s75
      %p79 = scmp.eq.s32.totalorder %s18, 0
      %p80 = por %p78, %p79
      %p81 = scmp.ne.s32.totalorder %s73, %s75
      %p82 = scmp.eq.s32.totalorder %s23, 1
      %p83 = por %p81, %p82
      %p84 = scmp.ne.s32.totalorder %s75, %s76
      %p85 = scmp.eq.s32.totalorder %s23, 0
      %p86 = por %p84, %p85
      %p87 = scmp.ne.s32.totalorder %s75, %s76
      %p88 = scmp.eq.s32.totalorder %s24, 1
      %p89 = por %p87, %p88
      %p91 = scmp.ne.s32.totalorder %s76, %s90
      %p92 = scmp.eq.s32.totalorder %s24, 0
      %p93 = por %p91, %p92
      %s95 = sadd.s32 %s94, 1
      %p98 = scmp.eq.s32.totalorder %s18, 1
      %p99 = scmp.ne.s32.totalorder %s94, %s96
      %p100 = scmp.eq.s32.totalorder %s18, 0
      %p101 = por %p99, %p100
      %p102 = scmp.ne.s32.totalorder %s94, %s96
      %p103 = scmp.eq.s32.totalorder %s23, 1
      %p104 = por %p102, %p103
      %p105 = scmp.ne.s32.totalorder %s96, %s97
      %p106 = scmp.eq.s32.totalorder %s23, 0
      %p107 = por %p105, %p106
      %p108 = scmp.ne.s32.totalorder %s96, %s97
      %p109 = scmp.eq.s32.totalorder %s24, 1
      %p110 = por %p108, %p109
      %p112 = scmp.ne.s32.totalorder %s97, %s111
      %p113 = scmp.eq.s32.totalorder %s24, 0
      %p114 = por %p112, %p113
      %s116 = sadd.s32 %s115, 1
      %p119 = scmp.eq.s32.totalorder %s18, 1
      %p120 = scmp.ne.s32.totalorder %s115, %s117
      %p121 = scmp.eq.s32.totalorder %s18, 0
      %p122 = por %p120, %p121
      %p123 = scmp.ne.s32.totalorder %s115, %s117
      %p124 = scmp.eq.s32.totalorder %s23, 1
      %p125 = por %p123, %p124
      %p126 = scmp.ne.s32.totalorder %s117, %s118
      %p127 = scmp.eq.s32.totalorder %s23, 0
      %p128 = por %p126, %p127
      %p129 = scmp.ne.s32.totalorder %s117, %s118
      %p130 = scmp.eq.s32.totalorder %s24, 1
      %p131 = por %p129, %p130
      %p133 = scmp.ne.s32.totalorder %s118, %s132
      %p134 = scmp.eq.s32.totalorder %s24, 0
      %p135 = por %p133, %p134
      %s136 = ssub.s32 %s18, %s25
      %p137 = scmp.eq.s32.totalorder %s136, 0
      %s139 = sadd.s32 %s138, 1
      %s140 = scalar_select %p137, %s138, %s139
      %p143 = pneg %p137
      %p144 = scmp.eq.s32.totalorder %s18, 1
      %p145 = por %p143, %p144
      %p146 = scmp.ne.s32.totalorder %s138, %s141
      %p147 = scmp.eq.s32.totalorder %s18, 0
      %p148 = por %p146, %p147
      %p149 = scmp.ne.s32.totalorder %s138, %s141
      %p150 = scmp.eq.s32.totalorder %s23, 1
      %p151 = por %p149, %p150
      %p152 = scmp.ne.s32.totalorder %s141, %s142
      %p153 = scmp.eq.s32.totalorder %s23, 0
      %p154 = por %p152, %p153
      %p155 = scmp.ne.s32.totalorder %s141, %s142
      %p156 = scmp.eq.s32.totalorder %s24, 1
      %p157 = por %p155, %p156
      %p159 = scmp.ne.s32.totalorder %s142, %s158
      %p160 = scmp.eq.s32.totalorder %s24, 0
      %p161 = por %p159, %p160
      %p162 = scmp.le.s32.totalorder 1, %s18
      %p163 = scmp.lt.s32.totalorder %s18, 3
      %p164 = pnand %p162, %p163
      %p165 = pneg %p164
      // Predicated region
      $region9: #{tpu_custom_call.1} parent=5 // pred_check
        _
      $region10: #{tpu_custom_call.1} parent=5 // pred_check_branch
        %167 = sbr.rel (%p164) target = $region12
      $region11: #{tpu_custom_call.1} parent=5 // pred_region
        %s168 = ssub.s32 %s18, 1
        // Predicated region
        $region13: #{tpu_custom_call.1} parent=11 // pred_check
          %p169 = pneg %p65
        $region14: #{tpu_custom_call.1} parent=11 // pred_check_branch
          %171 = sbr.rel (%p169) target = $region16
        $region15: #{tpu_custom_call.1} parent=11 // pred_region
          %s173 = ssub.s32 2048, 2048
          %174 = vsyncadd [#allocation6], %s173
          %s175 = sshll.u32 [#allocation5], 4
          %s176 = int_to_ptr.vmem [resolvable:$true] %s175
          %181 = dma.hbm_to_vmem [thread:$0]  %s1, 2048, %s176, [#allocation6], 128, 128, 8
        $region16: #{tpu_custom_call.1} parent=11 // pred_fallthru
          _
        // Predicated region
        $region17: #{tpu_custom_call.1} parent=11 // pred_check
          %p182 = pneg %p86
        $region18: #{tpu_custom_call.1} parent=11 // pred_check_branch
          %184 = sbr.rel (%p182) target = $region20
        $region19: #{tpu_custom_call.1} parent=11 // pred_region
          _
        $region20: #{tpu_custom_call.1} parent=11 // pred_fallthru
          _
        // Predicated region
        $region21: #{tpu_custom_call.1} parent=11 // pred_check
          %p185 = pneg %p107
        $region22: #{tpu_custom_call.1} parent=11 // pred_check_branch
          %187 = sbr.rel (%p185) target = $region24
        $region23: #{tpu_custom_call.1} parent=11 // pred_region
          _
        $region24: #{tpu_custom_call.1} parent=11 // pred_fallthru
          _
        // Predicated region
        $region25: #{tpu_custom_call.1} parent=11 // pred_check
          %p188 = pneg %p128
        $region26: #{tpu_custom_call.1} parent=11 // pred_check_branch
          %190 = sbr.rel (%p188) target = $region28
        $region27: #{tpu_custom_call.1} parent=11 // pred_region
          _
        $region28: #{tpu_custom_call.1} parent=11 // pred_fallthru
          _
      $region12: #{tpu_custom_call.1} parent=5 // pred_fallthru
        _
      %p191 = scmp.lt.s32.totalorder %s18, 2
      // Predicated region
      $region29: #{tpu_custom_call.1} parent=5 // pred_check
        %p192 = pneg %p191
      $region30: #{tpu_custom_call.1} parent=5 // pred_check_branch
        %194 = sbr.rel (%p192) target = $region32
      $region31: #{tpu_custom_call.1} parent=5 // pred_region
        // Predicated region
        $region33: #{tpu_custom_call.1} parent=31 // pred_check
          %p195 = pneg %p38
        $region34: #{tpu_custom_call.1} parent=31 // pred_check_branch
          %197 = sbr.rel (%p195) target = $region36
        $region35: #{tpu_custom_call.1} parent=31 // pred_region
          %s198 = sand.u32 %s28, 1
          %s199 = scalar_lea.sflag [#allocation3], %s198
          %s200 = sand.u32 %s28, 1
          %s201 = smul.addr %s200, 128
          %s202 = scalar_lea.vmem [#allocation2], %s201
          %s203 = smul.u32 16, %s18
          %s205 = ssub.s32 2048, 2048
          %206 = vsyncadd %s199, %s205
          %s207 = smul.addr %s203, 128
          %s208 = scalar_lea.hbm %s0, %s207
          %s209 = sshll.u32 %s202, 4
          %s210 = int_to_ptr.vmem [resolvable:$true] %s209
          %215 = dma.hbm_to_vmem [thread:$0]  %s208, 2048, %s210, %s199, 128, 128, 8
        $region36: #{tpu_custom_call.1} parent=31 // pred_fallthru
          _
      $region32: #{tpu_custom_call.1} parent=5 // pred_fallthru
        _
      %p216 = scmp.le.s32.totalorder 1, %s18
      %p217 = scmp.lt.s32.totalorder %s18, 3
      %p218 = pnand %p216, %p217
      %p219 = pneg %p218
      // Predicated region
      $region37: #{tpu_custom_call.1} parent=5 // pred_check
        _
      $region38: #{tpu_custom_call.1} parent=5 // pred_check_branch
        %221 = sbr.rel (%p218) target = $region40
      $region39: #{tpu_custom_call.1} parent=5 // pred_region
        %s222 = ssub.s32 %s18, 1
        %s223 = sand.u32 %s31, 1
        %s224 = scalar_lea.sflag [#allocation3], %s223
        %s225 = sand.u32 %s31, 1
        %s226 = smul.addr %s225, 128
        %s227 = scalar_lea.vmem [#allocation2], %s226
        // Predicated region
        $region41: #{tpu_custom_call.1} parent=39 // pred_check
          %p228 = pneg %p44
        $region42: #{tpu_custom_call.1} parent=39 // pred_check_branch
          %230 = sbr.rel (%p228) target = $region44
        $region43: #{tpu_custom_call.1} parent=39 // pred_region
          %231 = dma.done %s224, 2048
        $region44: #{tpu_custom_call.1} parent=39 // pred_fallthru
          _
        // Predicated region
        $region45: #{tpu_custom_call.1} parent=39 // pred_check
          %p232 = pneg %p65
        $region46: #{tpu_custom_call.1} parent=39 // pred_check_branch
          %234 = sbr.rel (%p232) target = $region48
        $region47: #{tpu_custom_call.1} parent=39 // pred_region
          %235 = dma.done [#allocation6], 2048
        $region48: #{tpu_custom_call.1} parent=39 // pred_fallthru
          _
        %s236 = sand.u32 %s31, 1
        %s237 = scalar_lea.sflag [#allocation3], %s236
        %s238 = sand.u32 %s31, 1
        %s239 = smul.addr %s238, 128
        %s240 = scalar_lea.vmem [#allocation2], %s239
        %p241 = pneg %p44
        %p242 = pneg %p41
        %p243 = pneg %p65
        %p244 = pneg %p62
        %p245 = pneg %p86
        %p246 = pneg %p83
        %p247 = pneg %p107
        %p248 = pneg %p104
        %p249 = pneg %p128
        %p250 = pneg %p125
        %p251 = pneg %p154
        %p252 = pneg %p151
        %s253 = sand.u32 %s141, 1
        %s254 = scalar_lea.sflag [#allocation4], %s253
        %s255 = sand.u32 %s141, 1
        %s256 = smul.addr %s255, 256
        %s257 = scalar_lea.vmem [#allocation7], %s256
        %s258 = smul.u32 16, %s23
        %s259 = smul.u32 16, %s23
        %v261 = vld [vmem:[%s227] sm:$0xff]
        %v262 = vld [vmem:[%s227 + $0x8] sm:$0xff]
        %v263 = vld [vmem:[%s227 + $0x10] sm:$0xff]
        %v264 = vld [vmem:[%s227 + $0x18] sm:$0xff]
        %v265 = vld [vmem:[%s227 + $0x20] sm:$0xff]
        %v266 = vld [vmem:[%s227 + $0x28] sm:$0xff]
        %v267 = vld [vmem:[%s227 + $0x30] sm:$0xff]
        %v268 = vld [vmem:[%s227 + $0x38] sm:$0xff]
        %v269 = vld [vmem:[%s227 + $0x40] sm:$0xff]
        %v270 = vld [vmem:[%s227 + $0x48] sm:$0xff]
        %v271 = vld [vmem:[%s227 + $0x50] sm:$0xff]
        %v272 = vld [vmem:[%s227 + $0x58] sm:$0xff]
        %v273 = vld [vmem:[%s227 + $0x60] sm:$0xff]
        %v274 = vld [vmem:[%s227 + $0x68] sm:$0xff]
        %v275 = vld [vmem:[%s227 + $0x70] sm:$0xff]
        %v276 = vld [vmem:[%s227 + $0x78] sm:$0xff]
        %v277 = vpack.c.bf16 %v262, %v261
        %v278 = vpack.c.bf16 %v264, %v263
        %v279 = vpack.c.bf16 %v266, %v265
        %v280 = vpack.c.bf16 %v268, %v267
        %v281 = vpack.c.bf16 %v270, %v269
        %v282 = vpack.c.bf16 %v272, %v271
        %v283 = vpack.c.bf16 %v274, %v273
        %v284 = vpack.c.bf16 %v276, %v275
        %v285 = vld [vmem:[#allocation5] sm:$0xff]
        %v286 = vld [vmem:[#allocation5 + $0x8] sm:$0xff]
        %v287 = vld [vmem:[#allocation5 + $0x10] sm:$0xff]
        %v288 = vld [vmem:[#allocation5 + $0x18] sm:$0xff]
        %v289 = vld [vmem:[#allocation5 + $0x20] sm:$0xff]
        %v290 = vld [vmem:[#allocation5 + $0x28] sm:$0xff]
        %v291 = vld [vmem:[#allocation5 + $0x30] sm:$0xff]
        %v292 = vld [vmem:[#allocation5 + $0x38] sm:$0xff]
        %v293 = vld [vmem:[#allocation5 + $0x40] sm:$0xff]
        %v294 = vld [vmem:[#allocation5 + $0x48] sm:$0xff]
        %v295 = vld [vmem:[#allocation5 + $0x50] sm:$0xff]
        %v296 = vld [vmem:[#allocation5 + $0x58] sm:$0xff]
        %v297 = vld [vmem:[#allocation5 + $0x60] sm:$0xff]
        %v298 = vld [vmem:[#allocation5 + $0x68] sm:$0xff]
        %v299 = vld [vmem:[#allocation5 + $0x70] sm:$0xff]
        %v300 = vld [vmem:[#allocation5 + $0x78] sm:$0xff]
        %v301 = vld [vmem:[%s2] sm:$0x3]
        %v302 = vld [vmem:[%s3] sm:$0x3]
        %v303 = vld [vmem:[%s4] sm:$0x3]
        %v305 = vlaneseq
        %v306 = vshrl.u32 %v305, 7
        %v307 = vsub.s32 0, %v306
        %v308 = vrot.slane %v301, %v307
        %v309 = vlaneseq
        %v310 = vshrl.u32 %v309, 7
        %v311 = vsub.s32 1, %v310
        %v312 = vrot.slane %v301, %v311
        %v331 = vunpack.c.l.b16 %v285
        %v332 = vunpack.c.h.b16 %v285
        %v333 = vunpack.c.l.b16 %v286
        %v334 = vunpack.c.h.b16 %v286
        %v335 = vunpack.c.l.b16 %v287
        %v336 = vunpack.c.h.b16 %v287
        %v337 = vunpack.c.l.b16 %v288
        %v338 = vunpack.c.h.b16 %v288
        %v339 = vunpack.c.l.b16 %v289
        %v340 = vunpack.c.h.b16 %v289
        %v341 = vunpack.c.l.b16 %v290
        %v342 = vunpack.c.h.b16 %v290
        %v343 = vunpack.c.l.b16 %v291
        %v344 = vunpack.c.h.b16 %v291
        %v345 = vunpack.c.l.b16 %v292
        %v346 = vunpack.c.h.b16 %v292
        %v347 = vunpack.c.l.b16 %v293
        %v348 = vunpack.c.h.b16 %v293
        %v349 = vunpack.c.l.b16 %v294
        %v350 = vunpack.c.h.b16 %v294
        %v351 = vunpack.c.l.b16 %v295
        %v352 = vunpack.c.h.b16 %v295
        %v353 = vunpack.c.l.b16 %v296
        %v354 = vunpack.c.h.b16 %v296
        %v355 = vunpack.c.l.b16 %v297
        %v356 = vunpack.c.h.b16 %v297
        %v357 = vunpack.c.l.b16 %v298
        %v358 = vunpack.c.h.b16 %v298
        %v359 = vunpack.c.l.b16 %v299
        %v360 = vunpack.c.h.b16 %v299
        %v361 = vunpack.c.l.b16 %v300
        %v362 = vunpack.c.h.b16 %v300
        %v363 = vpack.c.b16 %v333, %v331
        %v364 = vpack.c.b16 %v334, %v332
        %v365 = vpack.c.b16 %v337, %v335
        %v366 = vpack.c.b16 %v338, %v336
        %v367 = vpack.c.b16 %v341, %v339
        %v368 = vpack.c.b16 %v342, %v340
        %v369 = vpack.c.b16 %v345, %v343
        %v370 = vpack.c.b16 %v346, %v344
        %v371 = vpack.c.b16 %v349, %v347
        %v372 = vpack.c.b16 %v350, %v348
        %v373 = vpack.c.b16 %v353, %v351
        %v374 = vpack.c.b16 %v354, %v352
        %v375 = vpack.c.b16 %v357, %v355
        %v376 = vpack.c.b16 %v358, %v356
        %v377 = vpack.c.b16 %v361, %v359
        %v378 = vpack.c.b16 %v362, %v360
        %395 = vmatprep.subr.bf16.mxu0 %v364
        %396 = vmatpush1.bf16.msra.mxu0 %v363
        %397 = vmatprep.subr.bf16.mxu0 %v366
        %398 = vmatpush1.bf16.msra.mxu0 %v365
        %399 = vmatprep.subr.bf16.mxu0 %v368
        %400 = vmatpush1.bf16.msra.mxu0 %v367
        %401 = vmatprep.subr.bf16.mxu0 %v370
        %402 = vmatpush1.bf16.msra.mxu0 %v369
        %403 = vmatprep.subr.bf16.mxu0 %v372
        %404 = vmatpush1.bf16.msra.mxu0 %v371
        %405 = vmatprep.subr.bf16.mxu0 %v374
        %406 = vmatpush1.bf16.msra.mxu0 %v373
        %407 = vmatprep.subr.bf16.mxu0 %v376
        %408 = vmatpush1.bf16.msra.mxu0 %v375
        %409 = vmatprep.subr.bf16.mxu0 %v378
        %410 = vmatpush1.bf16.msra.mxu0 %v377
        %411 = vmatprep.subr.bf16.mxu0 0
        %412 = vmatpush1.bf16.msra.mxu0 0
        %413 = vmatprep.subr.bf16.mxu0 0
        %414 = vmatpush1.bf16.msra.mxu0 0
        %415 = vmatprep.subr.bf16.mxu0 0
        %416 = vmatpush1.bf16.msra.mxu0 0
        %417 = vmatprep.subr.bf16.mxu0 0
        %418 = vmatpush1.bf16.msra.mxu0 0
        %419 = vmatprep.subr.bf16.mxu0 0
        %420 = vmatpush1.bf16.msra.mxu0 0
        %421 = vmatprep.subr.bf16.mxu0 0
        %422 = vmatpush1.bf16.msra.mxu0 0
        %423 = vmatprep.subr.bf16.mxu0 0
        %424 = vmatpush1.bf16.msra.mxu0 0
        %425 = vmatprep.subr.bf16.mxu0 0
        %426 = vmatpush1.bf16.msra.mxu0 0
        %427 = vmatprep.mubr.bf16.mxu0 0
        %428 = vmatmul.mubr.bf16.gmra.mrb[0].mxu0 %v277
        %v429 = vpop.f32.mrb[0].mxu0
        %v430 = vadd.f32 %v308, %v429
        %v431 = vpop.f32.mrb[0].mxu0
        %v432 = vadd.f32 %v312, %v431
        %v433 = vpop.f32.mrb[0].mxu0
        %v434 = vadd.f32 %v308, %v433
        %v435 = vpop.f32.mrb[0].mxu0
        %v436 = vadd.f32 %v312, %v435
        %437 = vmatprep.mubr.bf16.mxu0 0
        %438 = vmatmul.mubr.bf16.gmra.mrb[0].mxu0 %v278
        %v439 = vpop.f32.mrb[0].mxu0
        %v440 = vadd.f32 %v308, %v439
        %v441 = vpop.f32.mrb[0].mxu0
        %v442 = vadd.f32 %v312, %v441
        %v443 = vpop.f32.mrb[0].mxu0
        %v444 = vadd.f32 %v308, %v443
        %v445 = vpop.f32.mrb[0].mxu0
        %v446 = vadd.f32 %v312, %v445
        %447 = vmatprep.mubr.bf16.mxu0 0
        %448 = vmatmul.mubr.bf16.gmra.mrb[0].mxu0 %v279
        %v449 = vpop.f32.mrb[0].mxu0
        %v450 = vadd.f32 %v308, %v449
        %v451 = vpop.f32.mrb[0].mxu0
        %v452 = vadd.f32 %v312, %v451
        %v453 = vpop.f32.mrb[0].mxu0
        %v454 = vadd.f32 %v308, %v453
        %v455 = vpop.f32.mrb[0].mxu0
        %v456 = vadd.f32 %v312, %v455
        %457 = vmatprep.mubr.bf16.mxu0 0
        %458 = vmatmul.mubr.bf16.gmra.mrb[0].mxu0 %v280
        %v459 = vpop.f32.mrb[0].mxu0
        %v460 = vadd.f32 %v308, %v459
        %v461 = vpop.f32.mrb[0].mxu0
        %v462 = vadd.f32 %v312, %v461
        %v463 = vpop.f32.mrb[0].mxu0
        %v464 = vadd.f32 %v308, %v463
        %v465 = vpop.f32.mrb[0].mxu0
        %v466 = vadd.f32 %v312, %v465
        %467 = vmatprep.mubr.bf16.mxu0 0
        %468 = vmatmul.mubr.bf16.gmra.mrb[0].mxu0 %v281
        %v469 = vpop.f32.mrb[0].mxu0
        %v470 = vadd.f32 %v308, %v469
        %v471 = vpop.f32.mrb[0].mxu0
        %v472 = vadd.f32 %v312, %v471
        %v473 = vpop.f32.mrb[0].mxu0
        %v474 = vadd.f32 %v308, %v473
        %v475 = vpop.f32.mrb[0].mxu0
        %v476 = vadd.f32 %v312, %v475
        %477 = vmatprep.mubr.bf16.mxu0 0
        %478 = vmatmul.mubr.bf16.gmra.mrb[0].mxu0 %v282
        %v479 = vpop.f32.mrb[0].mxu0
        %v480 = vadd.f32 %v308, %v479
        %v481 = vpop.f32.mrb[0].mxu0
        %v482 = vadd.f32 %v312, %v481
        %v483 = vpop.f32.mrb[0].mxu0
        %v484 = vadd.f32 %v308, %v483
        %v485 = vpop.f32.mrb[0].mxu0
        %v486 = vadd.f32 %v312, %v485
        %487 = vmatprep.mubr.bf16.mxu0 0
        %488 = vmatmul.mubr.bf16.gmra.mrb[0].mxu0 %v283
        %v489 = vpop.f32.mrb[0].mxu0
        %v490 = vadd.f32 %v308, %v489
        %v491 = vpop.f32.mrb[0].mxu0
        %v492 = vadd.f32 %v312, %v491
        %v493 = vpop.f32.mrb[0].mxu0
        %v494 = vadd.f32 %v308, %v493
        %v495 = vpop.f32.mrb[0].mxu0
        %v496 = vadd.f32 %v312, %v495
        %497 = vmatprep.mubr.bf16.mxu0 0
        %498 = vmatmul.mubr.bf16.gmra.mrb[0].mxu0 %v284
        %v499 = vpop.f32.mrb[0].mxu0
        %v500 = vadd.f32 %v308, %v499
        %v501 = vpop.f32.mrb[0].mxu0
        %v502 = vadd.f32 %v312, %v501
        %v503 = vpop.f32.mrb[0].mxu0
        %v504 = vadd.f32 %v308, %v503
        %v505 = vpop.f32.mrb[0].mxu0
        %v506 = vadd.f32 %v312, %v505
        %507 = vdwg.mxu0
        %v508 = vadd.f32 %v430, %v432
        %509 = vadd.xlane.f32.xlu0 %v508
        %v510 = vpop.xlane.xlu0 %509
        %v511 = vadd.f32 %v434, %v436
        %512 = vadd.xlane.f32.xlu0 %v511
        %v513 = vpop.xlane.xlu0 %512
        %v514 = vadd.f32 %v440, %v442
        %515 = vadd.xlane.f32.xlu0 %v514
        %v516 = vpop.xlane.xlu0 %515
        %v517 = vadd.f32 %v444, %v446
        %518 = vadd.xlane.f32.xlu0 %v517
        %v519 = vpop.xlane.xlu0 %518
        %v520 = vadd.f32 %v450, %v452
        %521 = vadd.xlane.f32.xlu0 %v520
        %v522 = vpop.xlane.xlu0 %521
        %v523 = vadd.f32 %v454, %v456
        %524 = vadd.xlane.f32.xlu0 %v523
        %v525 = vpop.xlane.xlu0 %524
        %v526 = vadd.f32 %v460, %v462
        %527 = vadd.xlane.f32.xlu0 %v526
        %v528 = vpop.xlane.xlu0 %527
        %v529 = vadd.f32 %v464, %v466
        %530 = vadd.xlane.f32.xlu0 %v529
        %v531 = vpop.xlane.xlu0 %530
        %v532 = vadd.f32 %v470, %v472
        %533 = vadd.xlane.f32.xlu0 %v532
        %v534 = vpop.xlane.xlu0 %533
        %v535 = vadd.f32 %v474, %v476
        %536 = vadd.xlane.f32.xlu0 %v535
        %v537 = vpop.xlane.xlu0 %536
        %v538 = vadd.f32 %v480, %v482
        %539 = vadd.xlane.f32.xlu0 %v538
        %v540 = vpop.xlane.xlu0 %539
        %v541 = vadd.f32 %v484, %v486
        %542 = vadd.xlane.f32.xlu0 %v541
        %v543 = vpop.xlane.xlu0 %542
        %v544 = vadd.f32 %v490, %v492
        %545 = vadd.xlane.f32.xlu0 %v544
        %v546 = vpop.xlane.xlu0 %545
        %v547 = vadd.f32 %v494, %v496
        %548 = vadd.xlane.f32.xlu0 %v547
        %v549 = vpop.xlane.xlu0 %548
        %v550 = vadd.f32 %v500, %v502
        %551 = vadd.xlane.f32.xlu0 %v550
        %v552 = vpop.xlane.xlu0 %551
        %v553 = vadd.f32 %v504, %v506
        %554 = vadd.xlane.f32.xlu0 %v553
        %v555 = vpop.xlane.xlu0 %554
        %v556 = vmul.f32 %v510, 0.00390625
        %v557 = vmul.f32 %v513, 0.00390625
        %v558 = vmul.f32 %v516, 0.00390625
        %v559 = vmul.f32 %v519, 0.00390625
        %v560 = vmul.f32 %v522, 0.00390625
        %v561 = vmul.f32 %v525, 0.00390625
        %v562 = vmul.f32 %v528, 0.00390625
        %v563 = vmul.f32 %v531, 0.00390625
        %v564 = vmul.f32 %v534, 0.00390625
        %v565 = vmul.f32 %v537, 0.00390625
        %v566 = vmul.f32 %v540, 0.00390625
        %v567 = vmul.f32 %v543, 0.00390625
        %v568 = vmul.f32 %v546, 0.00390625
        %v569 = vmul.f32 %v549, 0.00390625
        %v570 = vmul.f32 %v552, 0.00390625
        %v571 = vmul.f32 %v555, 0.00390625
        %v572 = vsub.f32 %v430, %v556
        %v573 = vsub.f32 %v432, %v556
        %v574 = vsub.f32 %v434, %v557
        %v575 = vsub.f32 %v436, %v557
        %v576 = vsub.f32 %v440, %v558
        %v577 = vsub.f32 %v442, %v558
        %v578 = vsub.f32 %v444, %v559
        %v579 = vsub.f32 %v446, %v559
        %v580 = vsub.f32 %v450, %v560
        %v581 = vsub.f32 %v452, %v560
        %v582 = vsub.f32 %v454, %v561
        %v583 = vsub.f32 %v456, %v561
        %v584 = vsub.f32 %v460, %v562
        %v585 = vsub.f32 %v462, %v562
        %v586 = vsub.f32 %v464, %v563
        %v587 = vsub.f32 %v466, %v563
        %v588 = vsub.f32 %v470, %v564
        %v589 = vsub.f32 %v472, %v564
        %v590 = vsub.f32 %v474, %v565
        %v591 = vsub.f32 %v476, %v565
        %v592 = vsub.f32 %v480, %v566
        %v593 = vsub.f32 %v482, %v566
        %v594 = vsub.f32 %v484, %v567
        %v595 = vsub.f32 %v486, %v567
        %v596 = vsub.f32 %v490, %v568
        %v597 = vsub.f32 %v492, %v568
        %v598 = vsub.f32 %v494, %v569
        %v599 = vsub.f32 %v496, %v569
        %v600 = vsub.f32 %v500, %v570
        %v601 = vsub.f32 %v502, %v570
        %v602 = vsub.f32 %v504, %v571
        %v603 = vsub.f32 %v506, %v571
        %v604 = vmul.f32 %v572, %v572
        %v605 = vmul.f32 %v573, %v573
        %v606 = vmul.f32 %v574, %v574
        %v607 = vmul.f32 %v575, %v575
        %v608 = vmul.f32 %v576, %v576
        %v609 = vmul.f32 %v577, %v577
        %v610 = vmul.f32 %v578, %v578
        %v611 = vmul.f32 %v579, %v579
        %v612 = vmul.f32 %v580, %v580
        %v613 = vmul.f32 %v581, %v581
        %v614 = vmul.f32 %v582, %v582
        %v615 = vmul.f32 %v583, %v583
        %v616 = vmul.f32 %v584, %v584
        %v617 = vmul.f32 %v585, %v585
        %v618 = vmul.f32 %v586, %v586
        %v619 = vmul.f32 %v587, %v587
        %v620 = vmul.f32 %v588, %v588
        %v621 = vmul.f32 %v589, %v589
        %v622 = vmul.f32 %v590, %v590
        %v623 = vmul.f32 %v591, %v591
        %v624 = vmul.f32 %v592, %v592
        %v625 = vmul.f32 %v593, %v593
        %v626 = vmul.f32 %v594, %v594
        %v627 = vmul.f32 %v595, %v595
        %v628 = vmul.f32 %v596, %v596
        %v629 = vmul.f32 %v597, %v597
        %v630 = vmul.f32 %v598, %v598
        %v631 = vmul.f32 %v599, %v599
        %v632 = vmul.f32 %v600, %v600
        %v633 = vmul.f32 %v601, %v601
        %v634 = vmul.f32 %v602, %v602
        %v635 = vmul.f32 %v603, %v603
        %v636 = vadd.f32 %v604, %v605
        %637 = vadd.xlane.f32.xlu0 %v636
        %v638 = vpop.xlane.xlu0 %637
        %v639 = vadd.f32 %v606, %v607
        %640 = vadd.xlane.f32.xlu0 %v639
        %v641 = vpop.xlane.xlu0 %640
        %v642 = vadd.f32 %v608, %v609
        %643 = vadd.xlane.f32.xlu0 %v642
        %v644 = vpop.xlane.xlu0 %643
        %v645 = vadd.f32 %v610, %v611
        %646 = vadd.xlane.f32.xlu0 %v645
        %v647 = vpop.xlane.xlu0 %646
        %v648 = vadd.f32 %v612, %v613
        %649 = vadd.xlane.f32.xlu0 %v648
        %v650 = vpop.xlane.xlu0 %649
        %v651 = vadd.f32 %v614, %v615
        %652 = vadd.xlane.f32.xlu0 %v651
        %v653 = vpop.xlane.xlu0 %652
        %v654 = vadd.f32 %v616, %v617
        %655 = vadd.xlane.f32.xlu0 %v654
        %v656 = vpop.xlane.xlu0 %655
        %v657 = vadd.f32 %v618, %v619
        %658 = vadd.xlane.f32.xlu0 %v657
        %v659 = vpop.xlane.xlu0 %658
        %v660 = vadd.f32 %v620, %v621
        %661 = vadd.xlane.f32.xlu0 %v660
        %v662 = vpop.xlane.xlu0 %661
        %v663 = vadd.f32 %v622, %v623
        %664 = vadd.xlane.f32.xlu0 %v663
        %v665 = vpop.xlane.xlu0 %664
        %v666 = vadd.f32 %v624, %v625
        %667 = vadd.xlane.f32.xlu0 %v666
        %v668 = vpop.xlane.xlu0 %667
        %v669 = vadd.f32 %v626, %v627
        %670 = vadd.xlane.f32.xlu0 %v669
        %v671 = vpop.xlane.xlu0 %670
        %v672 = vadd.f32 %v628, %v629
        %673 = vadd.xlane.f32.xlu0 %v672
        %v674 = vpop.xlane.xlu0 %673
        %v675 = vadd.f32 %v630, %v631
        %676 = vadd.xlane.f32.xlu0 %v675
        %v677 = vpop.xlane.xlu0 %676
        %v678 = vadd.f32 %v632, %v633
        %679 = vadd.xlane.f32.xlu0 %v678
        %v680 = vpop.xlane.xlu0 %679
        %v681 = vadd.f32 %v634, %v635
        %682 = vadd.xlane.f32.xlu0 %v681
        %v683 = vpop.xlane.xlu0 %682
        %v684 = vmul.f32 %v638, 0.00390625
        %v685 = vmul.f32 %v641, 0.00390625
        %v686 = vmul.f32 %v644, 0.00390625
        %v687 = vmul.f32 %v647, 0.00390625
        %v688 = vmul.f32 %v650, 0.00390625
        %v689 = vmul.f32 %v653, 0.00390625
        %v690 = vmul.f32 %v656, 0.00390625
        %v691 = vmul.f32 %v659, 0.00390625
        %v692 = vmul.f32 %v662, 0.00390625
        %v693 = vmul.f32 %v665, 0.00390625
        %v694 = vmul.f32 %v668, 0.00390625
        %v695 = vmul.f32 %v671, 0.00390625
        %v696 = vmul.f32 %v674, 0.00390625
        %v697 = vmul.f32 %v677, 0.00390625
        %v698 = vmul.f32 %v680, 0.00390625
        %v699 = vmul.f32 %v683, 0.00390625
        %v700 = vmax.f32 %v684, 0.0
        %v701 = vmax.f32 %v685, 0.0
        %v702 = vmax.f32 %v686, 0.0
        %v703 = vmax.f32 %v687, 0.0
        %v704 = vmax.f32 %v688, 0.0
        %v705 = vmax.f32 %v689, 0.0
        %v706 = vmax.f32 %v690, 0.0
        %v707 = vmax.f32 %v691, 0.0
        %v708 = vmax.f32 %v692, 0.0
        %v709 = vmax.f32 %v693, 0.0
        %v710 = vmax.f32 %v694, 0.0
        %v711 = vmax.f32 %v695, 0.0
        %v712 = vmax.f32 %v696, 0.0
        %v713 = vmax.f32 %v697, 0.0
        %v714 = vmax.f32 %v698, 0.0
        %v715 = vmax.f32 %v699, 0.0
        %v716 = vadd.f32 %v700, 1e-05
        %v717 = vadd.f32 %v701, 1e-05
        %v718 = vadd.f32 %v702, 1e-05
        %v719 = vadd.f32 %v703, 1e-05
        %v720 = vadd.f32 %v704, 1e-05
        %v721 = vadd.f32 %v705, 1e-05
        %v722 = vadd.f32 %v706, 1e-05
        %v723 = vadd.f32 %v707, 1e-05
        %v724 = vadd.f32 %v708, 1e-05
        %v725 = vadd.f32 %v709, 1e-05
        %v726 = vadd.f32 %v710, 1e-05
        %v727 = vadd.f32 %v711, 1e-05
        %v728 = vadd.f32 %v712, 1e-05
        %v729 = vadd.f32 %v713, 1e-05
        %v730 = vadd.f32 %v714, 1e-05
        %v731 = vadd.f32 %v715, 1e-05
        %v732 = vrsqrt.pop %v716
        %v733 = vrsqrt.pop %v717
        %v734 = vrsqrt.pop %v718
        %v735 = vrsqrt.pop %v719
        %v736 = vrsqrt.pop %v720
        %v737 = vrsqrt.pop %v721
        %v738 = vrsqrt.pop %v722
        %v739 = vrsqrt.pop %v723
        %v740 = vrsqrt.pop %v724
        %v741 = vrsqrt.pop %v725
        %v742 = vrsqrt.pop %v726
        %v743 = vrsqrt.pop %v727
        %v744 = vrsqrt.pop %v728
        %v745 = vrsqrt.pop %v729
        %v746 = vrsqrt.pop %v730
        %v747 = vrsqrt.pop %v731
        %v749 = vlaneseq
        %v750 = vshrl.u32 %v749, 7
        %v751 = vsub.s32 0, %v750
        %v752 = vrot.slane %v302, %v751
        %v753 = vlaneseq
        %v754 = vshrl.u32 %v753, 7
        %v755 = vsub.s32 1, %v754
        %v756 = vrot.slane %v302, %v755
        %v759 = vmul.f32 %v732, %v752
        %v760 = vmul.f32 %v732, %v756
        %v761 = vmul.f32 %v733, %v752
        %v762 = vmul.f32 %v733, %v756
        %v763 = vmul.f32 %v734, %v752
        %v764 = vmul.f32 %v734, %v756
        %v765 = vmul.f32 %v735, %v752
        %v766 = vmul.f32 %v735, %v756
        %v767 = vmul.f32 %v736, %v752
        %v768 = vmul.f32 %v736, %v756
        %v769 = vmul.f32 %v737, %v752
        %v770 = vmul.f32 %v737, %v756
        %v771 = vmul.f32 %v738, %v752
        %v772 = vmul.f32 %v738, %v756
        %v773 = vmul.f32 %v739, %v752
        %v774 = vmul.f32 %v739, %v756
        %v775 = vmul.f32 %v740, %v752
        %v776 = vmul.f32 %v740, %v756
        %v777 = vmul.f32 %v741, %v752
        %v778 = vmul.f32 %v741, %v756
        %v779 = vmul.f32 %v742, %v752
        %v780 = vmul.f32 %v742, %v756
        %v781 = vmul.f32 %v743, %v752
        %v782 = vmul.f32 %v743, %v756
        %v783 = vmul.f32 %v744, %v752
        %v784 = vmul.f32 %v744, %v756
        %v785 = vmul.f32 %v745, %v752
        %v786 = vmul.f32 %v745, %v756
        %v787 = vmul.f32 %v746, %v752
        %v788 = vmul.f32 %v746, %v756
        %v789 = vmul.f32 %v747, %v752
        %v790 = vmul.f32 %v747, %v756
        %v791 = vmul.f32 %v572, %v759
        %v792 = vmul.f32 %v573, %v760
        %v793 = vmul.f32 %v574, %v761
        %v794 = vmul.f32 %v575, %v762
        %v795 = vmul.f32 %v576, %v763
        %v796 = vmul.f32 %v577, %v764
        %v797 = vmul.f32 %v578, %v765
        %v798 = vmul.f32 %v579, %v766
        %v799 = vmul.f32 %v580, %v767
        %v800 = vmul.f32 %v581, %v768
        %v801 = vmul.f32 %v582, %v769
        %v802 = vmul.f32 %v583, %v770
        %v803 = vmul.f32 %v584, %v771
        %v804 = vmul.f32 %v585, %v772
        %v805 = vmul.f32 %v586, %v773
        %v806 = vmul.f32 %v587, %v774
        %v807 = vmul.f32 %v588, %v775
        %v808 = vmul.f32 %v589, %v776
        %v809 = vmul.f32 %v590, %v777
        %v810 = vmul.f32 %v591, %v778
        %v811 = vmul.f32 %v592, %v779
        %v812 = vmul.f32 %v593, %v780
        %v813 = vmul.f32 %v594, %v781
        %v814 = vmul.f32 %v595, %v782
        %v815 = vmul.f32 %v596, %v783
        %v816 = vmul.f32 %v597, %v784
        %v817 = vmul.f32 %v598, %v785
        %v818 = vmul.f32 %v599, %v786
        %v819 = vmul.f32 %v600, %v787
        %v820 = vmul.f32 %v601, %v788
        %v821 = vmul.f32 %v602, %v789
        %v822 = vmul.f32 %v603, %v790
        %v824 = vlaneseq
        %v825 = vshrl.u32 %v824, 7
        %v826 = vsub.s32 0, %v825
        %v827 = vrot.slane %v303, %v826
        %v828 = vlaneseq
        %v829 = vshrl.u32 %v828, 7
        %v830 = vsub.s32 1, %v829
        %v831 = vrot.slane %v303, %v830
        %v834 = vadd.f32 %v791, %v827
        %v835 = vadd.f32 %v792, %v831
        %v836 = vadd.f32 %v793, %v827
        %v837 = vadd.f32 %v794, %v831
        %v838 = vadd.f32 %v795, %v827
        %v839 = vadd.f32 %v796, %v831
        %v840 = vadd.f32 %v797, %v827
        %v841 = vadd.f32 %v798, %v831
        %v842 = vadd.f32 %v799, %v827
        %v843 = vadd.f32 %v800, %v831
        %v844 = vadd.f32 %v801, %v827
        %v845 = vadd.f32 %v802, %v831
        %v846 = vadd.f32 %v803, %v827
        %v847 = vadd.f32 %v804, %v831
        %v848 = vadd.f32 %v805, %v827
        %v849 = vadd.f32 %v806, %v831
        %v850 = vadd.f32 %v807, %v827
        %v851 = vadd.f32 %v808, %v831
        %v852 = vadd.f32 %v809, %v827
        %v853 = vadd.f32 %v810, %v831
        %v854 = vadd.f32 %v811, %v827
        %v855 = vadd.f32 %v812, %v831
        %v856 = vadd.f32 %v813, %v827
        %v857 = vadd.f32 %v814, %v831
        %v858 = vadd.f32 %v815, %v827
        %v859 = vadd.f32 %v816, %v831
        %v860 = vadd.f32 %v817, %v827
        %v861 = vadd.f32 %v818, %v831
        %v862 = vadd.f32 %v819, %v827
        %v863 = vadd.f32 %v820, %v831
        %v864 = vadd.f32 %v821, %v827
        %v865 = vadd.f32 %v822, %v831
        %v866 = vmax.f32 %v834, 0.0
        %v867 = vmax.f32 %v835, 0.0
        %v868 = vmax.f32 %v836, 0.0
        %v869 = vmax.f32 %v837, 0.0
        %v870 = vmax.f32 %v838, 0.0
        %v871 = vmax.f32 %v839, 0.0
        %v872 = vmax.f32 %v840, 0.0
        %v873 = vmax.f32 %v841, 0.0
        %v874 = vmax.f32 %v842, 0.0
        %v875 = vmax.f32 %v843, 0.0
        %v876 = vmax.f32 %v844, 0.0
        %v877 = vmax.f32 %v845, 0.0
        %v878 = vmax.f32 %v846, 0.0
        %v879 = vmax.f32 %v847, 0.0
        %v880 = vmax.f32 %v848, 0.0
        %v881 = vmax.f32 %v849, 0.0
        %v882 = vmax.f32 %v850, 0.0
        %v883 = vmax.f32 %v851, 0.0
        %v884 = vmax.f32 %v852, 0.0
        %v885 = vmax.f32 %v853, 0.0
        %v886 = vmax.f32 %v854, 0.0
        %v887 = vmax.f32 %v855, 0.0
        %v888 = vmax.f32 %v856, 0.0
        %v889 = vmax.f32 %v857, 0.0
        %v890 = vmax.f32 %v858, 0.0
        %v891 = vmax.f32 %v859, 0.0
        %v892 = vmax.f32 %v860, 0.0
        %v893 = vmax.f32 %v861, 0.0
        %v894 = vmax.f32 %v862, 0.0
        %v895 = vmax.f32 %v863, 0.0
        %v896 = vmax.f32 %v864, 0.0
        %v897 = vmax.f32 %v865, 0.0
        %898 = vst [vmem:[%s257] sm:$0xff] %v866
        %899 = vst [vmem:[%s257 + $0x8] sm:$0xff] %v867
        %900 = vst [vmem:[%s257 + $0x10] sm:$0xff] %v868
        %901 = vst [vmem:[%s257 + $0x18] sm:$0xff] %v869
        %902 = vst [vmem:[%s257 + $0x20] sm:$0xff] %v870
        %903 = vst [vmem:[%s257 + $0x28] sm:$0xff] %v871
        %904 = vst [vmem:[%s257 + $0x30] sm:$0xff] %v872
        %905 = vst [vmem:[%s257 + $0x38] sm:$0xff] %v873
        %906 = vst [vmem:[%s257 + $0x40] sm:$0xff] %v874
        %907 = vst [vmem:[%s257 + $0x48] sm:$0xff] %v875
        %908 = vst [vmem:[%s257 + $0x50] sm:$0xff] %v876
        %909 = vst [vmem:[%s257 + $0x58] sm:$0xff] %v877
        %910 = vst [vmem:[%s257 + $0x60] sm:$0xff] %v878
        %911 = vst [vmem:[%s257 + $0x68] sm:$0xff] %v879
        %912 = vst [vmem:[%s257 + $0x70] sm:$0xff] %v880
        %913 = vst [vmem:[%s257 + $0x78] sm:$0xff] %v881
        %914 = vst [vmem:[%s257 + $0x80] sm:$0xff] %v882
        %915 = vst [vmem:[%s257 + $0x88] sm:$0xff] %v883
        %916 = vst [vmem:[%s257 + $0x90] sm:$0xff] %v884
        %917 = vst [vmem:[%s257 + $0x98] sm:$0xff] %v885
        %918 = vst [vmem:[%s257 + $0xa0] sm:$0xff] %v886
        %919 = vst [vmem:[%s257 + $0xa8] sm:$0xff] %v887
        %920 = vst [vmem:[%s257 + $0xb0] sm:$0xff] %v888
        %921 = vst [vmem:[%s257 + $0xb8] sm:$0xff] %v889
        %922 = vst [vmem:[%s257 + $0xc0] sm:$0xff] %v890
        %923 = vst [vmem:[%s257 + $0xc8] sm:$0xff] %v891
        %924 = vst [vmem:[%s257 + $0xd0] sm:$0xff] %v892
        %925 = vst [vmem:[%s257 + $0xd8] sm:$0xff] %v893
        %926 = vst [vmem:[%s257 + $0xe0] sm:$0xff] %v894
        %927 = vst [vmem:[%s257 + $0xe8] sm:$0xff] %v895
        %928 = vst [vmem:[%s257 + $0xf0] sm:$0xff] %v896
        %929 = vst [vmem:[%s257 + $0xf8] sm:$0xff] %v897
        %s930 = sand.u32 %s141, 1
        %s931 = scalar_lea.sflag [#allocation4], %s930
        %s932 = sand.u32 %s141, 1
        %s933 = smul.addr %s932, 256
        %s934 = scalar_lea.vmem [#allocation7], %s933
        // Predicated region
        $region49: #{tpu_custom_call.1} parent=39 // pred_check
          %p935 = pneg %p151
        $region50: #{tpu_custom_call.1} parent=39 // pred_check_branch
          %937 = sbr.rel (%p935) target = $region52
        $region51: #{tpu_custom_call.1} parent=39 // pred_region
          %s938 = smul.u32 16, %s23
          %s940 = ssub.s32 4096, 4096
          %941 = vsyncadd %s931, %s940
          %s942 = smul.addr %s938, 2
          %s943 = smul.addr %s942, 128
          %s944 = scalar_lea.hbm %s5, %s943
          %s945 = sshll.u32 %s934, 4
          %s946 = int_to_ptr.vmem [resolvable:$true] %s945
          %951 = dma.vmem_to_hbm [thread:$0]  %s946, 4096, %s944, %s931, 256, 256, 16
        $region52: #{tpu_custom_call.1} parent=39 // pred_fallthru
          _
      $region40: #{tpu_custom_call.1} parent=5 // pred_fallthru
        _
      %p952 = scmp.le.s32.totalorder 2, %s18
      // Predicated region
      $region53: #{tpu_custom_call.1} parent=5 // pred_check
        %p953 = pneg %p952
      $region54: #{tpu_custom_call.1} parent=5 // pred_check_branch
        %955 = sbr.rel (%p953) target = $region56
      $region55: #{tpu_custom_call.1} parent=5 // pred_region
        %s956 = ssub.s32 %s18, 2
        // Predicated region
        $region57: #{tpu_custom_call.1} parent=55 // pred_check
          %p957 = pneg %p157
        $region58: #{tpu_custom_call.1} parent=55 // pred_check_branch
          %959 = sbr.rel (%p957) target = $region60
        $region59: #{tpu_custom_call.1} parent=55 // pred_region
          %s960 = sand.u32 %s142, 1
          %s961 = scalar_lea.sflag [#allocation4], %s960
          %s962 = sand.u32 %s142, 1
          %s963 = smul.addr %s962, 256
          %s964 = scalar_lea.vmem [#allocation7], %s963
          %965 = dma.done %s961, 4096
        $region60: #{tpu_custom_call.1} parent=55 // pred_fallthru
          _
      $region56: #{tpu_custom_call.1} parent=5 // pred_fallthru
        _
    $region6: #{tpu_custom_call.1} parent=1 // loop_footer
      %s22 = sadd.s32 1, %s18
    $region7: #{tpu_custom_call.1} parent=1 // loop_footer_branch
      %17 = sbr.rel target = $region3
    $region8: #{tpu_custom_call.1} parent=1 // loop_exit
      _
    %966 = vsyncpa [#allocation3], 1
    %s967 = scalar_lea.sflag [#allocation3], 1
    %968 = vsyncpa %s967, 1
    %969 = vsyncpa [#allocation6], 1
    %970 = vsyncpa [#allocation4], 1
    %s971 = scalar_lea.sflag [#allocation4], 1
    %972 = vsyncpa %s971, 1

</llo_original>
